<compile_context>
chip_gen: v7x
topology: tpu7x:2x2x1
jax: 0.10.0
libtpu: 0.0.40
codegen_flags: <defaults>
</compile_context>

<pallas_src>
import jax
import jax.numpy as jnp
from jax.experimental import pallas as pl
from jax.experimental.pallas import tpu as pltpu


def aprelu_kernel(x_ref, p_ref, o_ref):
    # x_ref: (tr, tc) tile of the flattened, lane-padded [B*C, L_pad] input.
    # p_ref: (tr, 3) f32 per-row coefficients [gamma+1, gamma-alpha, beta],
    #        broadcast across the lane axis.
    x = x_ref[...].astype(jnp.float32)
    p = p_ref[...]
    c_pos = p[:, 0:1]
    c_neg = p[:, 1:2]
    b = p[:, 2:3]
    coef = jnp.where(x >= 0.0, c_pos, c_neg)
    o_ref[...] = (coef * x + b).astype(o_ref.dtype)


def _round_up(x, m):
    return ((x + m - 1) // m) * m


def _choose_tiles(R, L_pad, itemsize):
    """Pick (tile_rows, tile_cols) for the flattened [R, L_pad] array."""
    # dtype-dependent sublane alignment (packed-row layouts for sub-32-bit).
    row_align = {4: 8, 2: 16, 1: 32}.get(itemsize, 8)
    col_target = 2048                       # lanes
    block_bytes_target = 4 * 1024 * 1024    # ~4 MiB per x/out block

    # --- lane (column) tile: multiple of 128, prefer exact division of L_pad
    if L_pad <= col_target:
        tile_cols = L_pad
    else:
        n = L_pad // 128
        tgt = col_target // 128
        best = 1
        for d in range(tgt, 0, -1):
            if n % d == 0:
                best = d
                break
        if best * 128 >= 512:
            tile_cols = best * 128          # divides L_pad -> no ragged block
        else:
            tile_cols = col_target          # accept one ragged trailing block

    # --- sublane (row) tile: sized so the block is ~block_bytes_target
    row_target = max(row_align, block_bytes_target // (tile_cols * itemsize))
    row_target = max(row_align, (row_target // row_align) * row_align)
    tile_rows = R if R <= row_target else row_target

    # --- megacore: guarantee >= 2 blocks along a parallel axis when possible
    grid_r = pl.cdiv(R, tile_rows)
    grid_c = pl.cdiv(L_pad, tile_cols)
    if grid_r * grid_c == 1:
        if L_pad >= 256:
            tile_cols = 128 * ((L_pad // 128 + 1) // 2)
        elif R >= 2 * row_align:
            tile_rows = row_align * ((pl.cdiv(R, row_align) + 1) // 2)

    return tile_rows, tile_cols


def aprelu(x, gamma, beta, alpha):
    """x: [B, C, H, W]; gamma/beta/alpha: [C]. Returns [B, C, H, W]."""
    B, C, H, W = x.shape
    R = B * C
    L = H * W
    itemsize = jnp.dtype(x.dtype).itemsize

    # Flatten so the long spatial axis sits on the 128-lane axis; pad lanes up
    # to a multiple of 128 so every store stays unmasked / lane-dense.
    x2 = x.reshape(R, L)
    L_pad = _round_up(L, 128)
    if L_pad != L:
        x2 = jnp.pad(x2, ((0, 0), (0, L_pad - L)))

    # Per-row coefficients, packed into one (R, 3) f32 array (1 DMA per tile).
    # Coefficients stay f32 inside the kernel; only the output is cast.
    params_c = jnp.stack(
        [gamma.astype(jnp.float32) + 1.0,
         gamma.astype(jnp.float32) - alpha.astype(jnp.float32),
         beta.astype(jnp.float32)],
        axis=-1,
    )                                  # (C, 3)
    params = jnp.tile(params_c, (B, 1))  # (R, 3)

    tile_rows, tile_cols = _choose_tiles(R, L_pad, itemsize)
    grid = (pl.cdiv(R, tile_rows), pl.cdiv(L_pad, tile_cols))

    x_spec = pl.BlockSpec((tile_rows, tile_cols), lambda i, j: (i, j))
    p_spec = pl.BlockSpec((tile_rows, 3), lambda i, j: (i, 0))

    # Explicit VMEM budget: 2 double-buffered big blocks (x + out) plus the
    # param block (padded to 128 lanes), with headroom.  Kept well under the
    # 64 MiB physical VMEM on v7x.
    block_bytes = tile_rows * tile_cols * itemsize
    vmem_need = 2 * 2 * block_bytes + 2 * tile_rows * 128 * 4
    vmem_limit = max(16 << 20, min(int(vmem_need * 1.5) + (4 << 20), 56 << 20))

    cost = pl.CostEstimate(
        flops=3 * R * L_pad,
        transcendentals=0,
        bytes_accessed=2 * R * L_pad * itemsize + R * 3 * 4,
    )

    out2 = pl.pallas_call(
        aprelu_kernel,
        out_shape=jax.ShapeDtypeStruct((R, L_pad), x.dtype),
        grid_spec=pltpu.PrefetchScalarGridSpec(
            num_scalar_prefetch=0,
            grid=grid,
            in_specs=[x_spec, p_spec],
            out_specs=x_spec,
        ),
        compiler_params=pltpu.CompilerParams(
            dimension_semantics=("parallel", "parallel"),
            vmem_limit_bytes=vmem_limit,
        ),
        cost_estimate=cost,
    )(x2, params)

    if L_pad != L:
        out2 = out2[:, :L]
    return out2.reshape(B, C, H, W)


def aprelu_ref(x, gamma, beta, alpha):
    """Pure-JAX reference of the PyTorch forward (unfolded formula)."""
    g = gamma.reshape(1, -1, 1, 1)
    b = beta.reshape(1, -1, 1, 1)
    a = alpha.reshape(1, -1, 1, 1)
    x_affine = g * x + b
    x_prelu = jnp.maximum(x, 0.0) + a * jnp.maximum(-x, 0.0)
    return x_affine + x_prelu


if __name__ == "__main__":
    B, C, H, W = 2, 4, 16, 16

    key = jax.random.PRNGKey(0)
    x = jax.random.normal(key, (B, C, H, W), dtype=jnp.float32)

    # Deterministic parameter init matching the module's __init__:
    #   gamma = ones(C), beta = zeros(C), alpha = full(C, 0.25)
    gamma = jnp.ones((C,), dtype=jnp.float32)
    beta = jnp.zeros((C,), dtype=jnp.float32)
    alpha = jnp.full((C,), 0.25, dtype=jnp.float32)

    out = aprelu(x, gamma, beta, alpha)
    out = jax.block_until_ready(out)

    expected = aprelu_ref(x, gamma, beta, alpha)
    assert out.shape == (B, C, H, W)
    assert jnp.allclose(out, expected, atol=1e-6, rtol=1e-6), "mismatch vs reference"

    print("KERNEL_OK")
</pallas_src>

<mosaic_0001>
module attributes {stable_mosaic.version = 11 : i64} {
  func.func @aprelu_kernel(%arg0: i32, %arg1: i32, %arg2: memref<8x128xf32, #tpu.memory_space<vmem>>, %arg3: memref<8x3xf32, #tpu.memory_space<vmem>>, %arg4: memref<8x128xf32, #tpu.memory_space<vmem>>) attributes {dimension_semantics = [#tpu.dimension_semantics<parallel>, #tpu.dimension_semantics<parallel>], iteration_bounds = array<i64: 1, 2>, scalar_prefetch = 0 : i64, scratch_operands = 0 : i64, tpu.core_type = #tpu.core_type<tc>, window_params = [{transform_indices = @transform_0, window_bounds = array<i64: 8, 128>}, {transform_indices = @transform_1, window_bounds = array<i64: 8, 3>}, {transform_indices = @transform_2, window_bounds = array<i64: 8, 128>}]} {
    %c0 = arith.constant 0 : index
    %c0_0 = arith.constant 0 : index
    %0 = vector.load %arg2[%c0, %c0_0] : memref<8x128xf32, #tpu.memory_space<vmem>>, vector<8x128xf32>
    %c0_1 = arith.constant 0 : index
    %c0_2 = arith.constant 0 : index
    %1 = vector.load %arg3[%c0_1, %c0_2] : memref<8x3xf32, #tpu.memory_space<vmem>>, vector<8x3xf32>
    %2 = vector.extract_strided_slice %1 {offsets = [0, 0], sizes = [8, 1], strides = [1, 1]} : vector<8x3xf32> to vector<8x1xf32>
    %3 = vector.extract_strided_slice %1 {offsets = [0, 1], sizes = [8, 1], strides = [1, 1]} : vector<8x3xf32> to vector<8x1xf32>
    %4 = vector.extract_strided_slice %1 {offsets = [0, 2], sizes = [8, 1], strides = [1, 1]} : vector<8x3xf32> to vector<8x1xf32>
    %cst = arith.constant 0.000000e+00 : f32
    %5 = vector.broadcast %cst : f32 to vector<8x128xf32>
    %6 = arith.cmpf oge, %0, %5 : vector<8x128xf32>
    %7 = vector.shape_cast %2 : vector<8x1xf32> to vector<8x1xf32>
    %8 = vector.broadcast %7 : vector<8x1xf32> to vector<8x128xf32>
    %9 = vector.shape_cast %3 : vector<8x1xf32> to vector<8x1xf32>
    %10 = vector.broadcast %9 : vector<8x1xf32> to vector<8x128xf32>
    %11 = arith.select %6, %8, %10 : vector<8x128xi1>, vector<8x128xf32>
    %12 = arith.mulf %11, %0 : vector<8x128xf32>
    %13 = vector.broadcast %4 : vector<8x1xf32> to vector<8x128xf32>
    %14 = arith.addf %12, %13 : vector<8x128xf32>
    %c0_3 = arith.constant 0 : index
    %c0_4 = arith.constant 0 : index
    %15 = vector.load %arg4[%c0_3, %c0_4] : memref<8x128xf32, #tpu.memory_space<vmem>>, vector<8x128xf32>
    tpu.vector_store %arg4[%c0_3, %c0_4], %14 {strides = array<i32>} : memref<8x128xf32, #tpu.memory_space<vmem>>, vector<8x128xf32>,
    return
  }
  func.func @transform_0(%arg0: i32, %arg1: i32) -> (i32, i32) {
    %c0_i32 = arith.constant 0 : i32
    return %arg0, %arg1 : i32, i32
  }
  func.func @transform_1(%arg0: i32, %arg1: i32) -> (i32, i32) {
    %c0_i32 = arith.constant 0 : i32
    %c0_i32_0 = arith.constant 0 : i32
    return %arg0, %c0_i32 : i32, i32
  }
  func.func @transform_2(%arg0: i32, %arg1: i32) -> (i32, i32) {
    %c0_i32 = arith.constant 0 : i32
    return %arg0, %arg1 : i32, i32
  }
}

</mosaic_0001>

<llo_original>
// kernel: tpu_custom_call.1
$region0: #{tpu_custom_call.1}
  #allocation0 [shape = 'u32[]', space=smem, size = 0x4, offset = 0x4, fixed_abs, tag = 'smem constant byte address 0x4 - core index']
  #allocation1 [shape = 'u32[144,128]{1,0:T(1,128)}', space=vmem, size = 0x12000, scoped, tag = 'internal scratch']
  %s0 = inlined_call_operand.hbm [shape: f32[8,256], index: 0, kind: input, shape index: {}]
  %s1 = inlined_call_operand.vmem [shape: f32[8,3], index: 1, kind: input, shape index: {}]
  %s2 = inlined_call_operand.hbm [shape: f32[8,256], index: 2, kind: output, shape index: {}]
  %s3 = sld [smem:[#allocation0]]
  $region45: #{tpu_custom_call.1} parent=0
    _
  %s5 = ssub.s32 1, %s3
  %s6 = scalar_select 0, %s5, %s3
  $region1: #{tpu_custom_call.1} parent=0
    #allocation2 [shape = 'u8[8192]{0}', space=vmem, size = 0x2000, scoped, tag = 'input window, operand 0']
    #allocation3 [shape = 's32[2]{0}', space=sflag, size = 0x8, scoped, tag = 'scoped memory for tpu_custom_call.1']
    #allocation4 [shape = 's32[2]{0}', space=sflag, size = 0x8, scoped, tag = 'scoped memory for tpu_custom_call.1']
    #allocation5 [shape = 'u8[8192]{0}', space=vmem, size = 0x2000, scoped, tag = 'output window, operand 0']
    %7 = vsyncpa [#allocation3], 0
    %s8 = scalar_lea.sflag [#allocation3], 1
    %9 = vsyncpa %s8, 0
    %10 = vsyncpa [#allocation4], 0
    %s11 = scalar_lea.sflag [#allocation4], 1
    %12 = vsyncpa %s11, 0
    loop: start=0, step=1, limit=4
    $region2: #{tpu_custom_call.1} parent=1 // loop_pre_header
      _
    $region3: #{tpu_custom_call.1} parent=1 // loop_header
      %s14 = sphi 0, %s18
      %p15 = scmp.ge.s32.totalorder %s14, 4
      %s21 = sphi 0, %s33
      %s22 = sphi 0, %s29
      %s23 = sphi 0, %s21
      %s24 = sphi 0, %s22
      %s25 = sphi 0, %s23
      %s26 = sphi 0, %s24
      %s38 = sphi 0, %s40
      %s41 = sphi 0, %s38
      %s42 = sphi 0, %s41
      %s58 = sphi 0, %s42
      %s64 = sphi 0, %s66
      %s67 = sphi 0, %s64
      %s68 = sphi 0, %s67
      %s84 = sphi 0, %s68
      %s92 = sphi 0, %s94
      %s95 = sphi 0, %s92
      %s96 = sphi 0, %s95
      %s112 = sphi 0, %s96
    $region4: #{tpu_custom_call.1} parent=1 // loop_header_branch
      %17 = sbr.rel (%p15) target = $region8
    $region5: #{tpu_custom_call.1} parent=1 // loop_body
      %s19 = ssub.s32 %s14, 1
      %s20 = ssub.s32 %s14, 2
      %s27 = sadd.s32 1, %s22
      %p28 = scmp.ge.s32.totalorder %s27, 2
      %s29 = scalar_select %p28, 0, %s27
      %s30 = sadd.s32 1, %s21
      %s31 = scalar_select %p28, %s30, %s21
      %p32 = scmp.ge.s32.totalorder %s31, 1
      %s33 = scalar_select %p32, 0, %s31
      %s34 = ssub.s32 %s21, %s33
      %s35 = ssub.s32 %s22, %s29
      %s36 = sor.u32 %s34, %s35
      %p37 = scmp.eq.s32.totalorder %s36, 0
      %s39 = sadd.s32 %s38, 1
      %s40 = scalar_select %p37, %s38, %s39
      %p43 = pneg %p37
      %p44 = scmp.eq.s32.totalorder %s14, 1
      %p45 = por %p43, %p44
      %p46 = scmp.ne.s32.totalorder %s38, %s41
      %p47 = scmp.eq.s32.totalorder %s14, 0
      %p48 = por %p46, %p47
      %p49 = scmp.ne.s32.totalorder %s38, %s41
      %p50 = scmp.eq.s32.totalorder %s19, 1
      %p51 = por %p49, %p50
      %p52 = scmp.ne.s32.totalorder %s41, %s42
      %p53 = scmp.eq.s32.totalorder %s19, 0
      %p54 = por %p52, %p53
      %p55 = scmp.ne.s32.totalorder %s41, %s42
      %p56 = scmp.eq.s32.totalorder %s20, 1
      %p57 = por %p55, %p56
      %p59 = scmp.ne.s32.totalorder %s42, %s58
      %p60 = scmp.eq.s32.totalorder %s20, 0
      %p61 = por %p59, %p60
      %s62 = ssub.s32 %s21, %s33
      %p63 = scmp.eq.s32.totalorder %s62, 0
      %s65 = sadd.s32 %s64, 1
      %s66 = scalar_select %p63, %s64, %s65
      %p69 = pneg %p63
      %p70 = scmp.eq.s32.totalorder %s14, 1
      %p71 = por %p69, %p70
      %p72 = scmp.ne.s32.totalorder %s64, %s67
      %p73 = scmp.eq.s32.totalorder %s14, 0
      %p74 = por %p72, %p73
      %p75 = scmp.ne.s32.totalorder %s64, %s67
      %p76 = scmp.eq.s32.totalorder %s19, 1
      %p77 = por %p75, %p76
      %p78 = scmp.ne.s32.totalorder %s67, %s68
      %p79 = scmp.eq.s32.totalorder %s19, 0
      %p80 = por %p78, %p79
      %p81 = scmp.ne.s32.totalorder %s67, %s68
      %p82 = scmp.eq.s32.totalorder %s20, 1
      %p83 = por %p81, %p82
      %p85 = scmp.ne.s32.totalorder %s68, %s84
      %p86 = scmp.eq.s32.totalorder %s20, 0
      %p87 = por %p85, %p86
      %s88 = ssub.s32 %s21, %s33
      %s89 = ssub.s32 %s22, %s29
      %s90 = sor.u32 %s88, %s89
      %p91 = scmp.eq.s32.totalorder %s90, 0
      %s93 = sadd.s32 %s92, 1
      %s94 = scalar_select %p91, %s92, %s93
      %p97 = pneg %p91
      %p98 = scmp.eq.s32.totalorder %s14, 1
      %p99 = por %p97, %p98
      %p100 = scmp.ne.s32.totalorder %s92, %s95
      %p101 = scmp.eq.s32.totalorder %s14, 0
      %p102 = por %p100, %p101
      %p103 = scmp.ne.s32.totalorder %s92, %s95
      %p104 = scmp.eq.s32.totalorder %s19, 1
      %p105 = por %p103, %p104
      %p106 = scmp.ne.s32.totalorder %s95, %s96
      %p107 = scmp.eq.s32.totalorder %s19, 0
      %p108 = por %p106, %p107
      %p109 = scmp.ne.s32.totalorder %s95, %s96
      %p110 = scmp.eq.s32.totalorder %s20, 1
      %p111 = por %p109, %p110
      %p113 = scmp.ne.s32.totalorder %s96, %s112
      %p114 = scmp.eq.s32.totalorder %s20, 0
      %p115 = por %p113, %p114
      %p116 = scmp.le.s32.totalorder 1, %s14
      %p117 = scmp.lt.s32.totalorder %s14, 3
      %p118 = pnand %p116, %p117
      %p119 = pneg %p118
      // Predicated region
      $region9: #{tpu_custom_call.1} parent=5 // pred_check
        _
      $region10: #{tpu_custom_call.1} parent=5 // pred_check_branch
        %121 = sbr.rel (%p118) target = $region12
      $region11: #{tpu_custom_call.1} parent=5 // pred_region
        %s122 = ssub.s32 %s14, 1
        // Predicated region
        $region13: #{tpu_custom_call.1} parent=11 // pred_check
          %p123 = pneg %p80
        $region14: #{tpu_custom_call.1} parent=11 // pred_check_branch
          %125 = sbr.rel (%p123) target = $region16
        $region15: #{tpu_custom_call.1} parent=11 // pred_region
          %p126 = scmp.lt.s32.totalorder %s23, 0
          %s127 = scalar_select %p126, %s23, 0
          %s128 = smul.addr %s127, 8
          %s129 = scalar_lea.vmem %s1, %s128
        $region16: #{tpu_custom_call.1} parent=11 // pred_fallthru
          _
      $region12: #{tpu_custom_call.1} parent=5 // pred_fallthru
        _
      %p130 = scmp.lt.s32.totalorder %s14, 2
      // Predicated region
      $region17: #{tpu_custom_call.1} parent=5 // pred_check
        %p131 = pneg %p130
      $region18: #{tpu_custom_call.1} parent=5 // pred_check_branch
        %133 = sbr.rel (%p131) target = $region20
      $region19: #{tpu_custom_call.1} parent=5 // pred_region
        // Predicated region
        $region21: #{tpu_custom_call.1} parent=19 // pred_check
          %p134 = pneg %p48
        $region22: #{tpu_custom_call.1} parent=19 // pred_check_branch
          %136 = sbr.rel (%p134) target = $region24
        $region23: #{tpu_custom_call.1} parent=19 // pred_region
          %s137 = sand.u32 %s38, 1
          %s138 = scalar_lea.sflag [#allocation3], %s137
          %s139 = sand.u32 %s38, 1
          %s140 = smul.addr %s139, 8
          %s141 = scalar_lea.vmem [#allocation2], %s140
          %s143 = ssub.s32 128, 128
          %144 = vsyncadd %s138, %s143
          %s145 = smul.addr %s21, 2
          %s146 = sadd.s32 %s22, %s145
          %s147 = smul.addr %s146, 128
          %s148 = scalar_lea.hbm %s0, %s147
          %s150 = sshll.u32 %s141, 4
          %s151 = int_to_ptr.vmem [resolvable:$true] %s150
          %153 = dma.hbm_to_vmem [thread:$0]  %s148, 128, %s151, %s138
        $region24: #{tpu_custom_call.1} parent=19 // pred_fallthru
          _
      $region20: #{tpu_custom_call.1} parent=5 // pred_fallthru
        _
      %p154 = scmp.le.s32.totalorder 1, %s14
      %p155 = scmp.lt.s32.totalorder %s14, 3
      %p156 = pnand %p154, %p155
      %p157 = pneg %p156
      // Predicated region
      $region25: #{tpu_custom_call.1} parent=5 // pred_check
        _
      $region26: #{tpu_custom_call.1} parent=5 // pred_check_branch
        %159 = sbr.rel (%p156) target = $region28
      $region27: #{tpu_custom_call.1} parent=5 // pred_region
        %s160 = ssub.s32 %s14, 1
        %s161 = sand.u32 %s41, 1
        %s162 = scalar_lea.sflag [#allocation3], %s161
        %s163 = sand.u32 %s41, 1
        %s164 = smul.addr %s163, 8
        %s165 = scalar_lea.vmem [#allocation2], %s164
        // Predicated region
        $region29: #{tpu_custom_call.1} parent=27 // pred_check
          %p166 = pneg %p54
        $region30: #{tpu_custom_call.1} parent=27 // pred_check_branch
          %168 = sbr.rel (%p166) target = $region32
        $region31: #{tpu_custom_call.1} parent=27 // pred_region
          %169 = dma.done %s162, 128
        $region32: #{tpu_custom_call.1} parent=27 // pred_fallthru
          _
        %s170 = sand.u32 %s41, 1
        %s171 = scalar_lea.sflag [#allocation3], %s170
        %s172 = sand.u32 %s41, 1
        %s173 = smul.addr %s172, 8
        %s174 = scalar_lea.vmem [#allocation2], %s173
        %p175 = pneg %p54
        %p176 = pneg %p51
        %p177 = scmp.lt.s32.totalorder %s23, 0
        %s178 = scalar_select %p177, %s23, 0
        %s179 = smul.addr %s178, 8
        %s180 = scalar_lea.vmem %s1, %s179
        %p181 = pneg %p80
        %p182 = pneg %p77
        %p183 = pneg %p108
        %p184 = pneg %p105
        %s185 = sand.u32 %s95, 1
        %s186 = scalar_lea.sflag [#allocation4], %s185
        %s187 = sand.u32 %s95, 1
        %s188 = smul.addr %s187, 8
        %s189 = scalar_lea.vmem [#allocation5], %s188
        %p190 = scmp.lt.s32.totalorder %s23, 0
        %s191 = scalar_select %p190, %s23, 0
        %s192 = smul.addr %s191, 8
        %s193 = scalar_lea.vmem %s1, %s192
        %v194 = vld [vmem:[%s165] sm:$0xff]
        %v195 = vld [vmem:[%s193] sm:$0xff]
        %vm196 = vcmp.ge.f32.partialorder %v194, 0.0
        %198 = vset.pattern.permute.xlu0 0
        %199 = vperm.xlu0 %198, %v195
        %v200 = vpop.permute.xlu0 %199
        %202 = vset.pattern.permute.xlu0 1
        %203 = vperm.xlu0 %202, %v195
        %v204 = vpop.permute.xlu0 %203
        %v206 = vsel %vm196, %v200, %v204
        %v207 = vmul.f32 %v206, %v194
        %208 = vset.pattern.permute.xlu0 2
        %209 = vperm.xlu0 %208, %v195
        %v210 = vpop.permute.xlu0 %209
        %v212 = vadd.f32 %v207, %v210
        %213 = vst [vmem:[%s189] sm:$0xff] %v212
        %s214 = sand.u32 %s95, 1
        %s215 = scalar_lea.sflag [#allocation4], %s214
        %s216 = sand.u32 %s95, 1
        %s217 = smul.addr %s216, 8
        %s218 = scalar_lea.vmem [#allocation5], %s217
        // Predicated region
        $region33: #{tpu_custom_call.1} parent=27 // pred_check
          %p219 = pneg %p105
        $region34: #{tpu_custom_call.1} parent=27 // pred_check_branch
          %221 = sbr.rel (%p219) target = $region36
        $region35: #{tpu_custom_call.1} parent=27 // pred_region
          %s223 = ssub.s32 128, 128
          %224 = vsyncadd %s215, %s223
          %s225 = smul.addr %s23, 2
          %s226 = sadd.s32 %s24, %s225
          %s227 = smul.addr %s226, 128
          %s228 = scalar_lea.hbm %s2, %s227
          %s230 = sshll.u32 %s218, 4
          %s231 = int_to_ptr.vmem [resolvable:$true] %s230
          %233 = dma.vmem_to_hbm [thread:$0]  %s231, 128, %s228, %s215
        $region36: #{tpu_custom_call.1} parent=27 // pred_fallthru
          _
      $region28: #{tpu_custom_call.1} parent=5 // pred_fallthru
        _
      %p234 = scmp.le.s32.totalorder 2, %s14
      // Predicated region
      $region37: #{tpu_custom_call.1} parent=5 // pred_check
        %p235 = pneg %p234
      $region38: #{tpu_custom_call.1} parent=5 // pred_check_branch
        %237 = sbr.rel (%p235) target = $region40
      $region39: #{tpu_custom_call.1} parent=5 // pred_region
        %s238 = ssub.s32 %s14, 2
        // Predicated region
        $region41: #{tpu_custom_call.1} parent=39 // pred_check
          %p239 = pneg %p111
        $region42: #{tpu_custom_call.1} parent=39 // pred_check_branch
          %241 = sbr.rel (%p239) target = $region44
        $region43: #{tpu_custom_call.1} parent=39 // pred_region
          %s242 = sand.u32 %s96, 1
          %s243 = scalar_lea.sflag [#allocation4], %s242
          %s244 = sand.u32 %s96, 1
          %s245 = smul.addr %s244, 8
          %s246 = scalar_lea.vmem [#allocation5], %s245
          %247 = dma.done %s243, 128
        $region44: #{tpu_custom_call.1} parent=39 // pred_fallthru
          _
      $region40: #{tpu_custom_call.1} parent=5 // pred_fallthru
        _
    $region6: #{tpu_custom_call.1} parent=1 // loop_footer
      %s18 = sadd.s32 1, %s14
    $region7: #{tpu_custom_call.1} parent=1 // loop_footer_branch
      %13 = sbr.rel target = $region3
    $region8: #{tpu_custom_call.1} parent=1 // loop_exit
      _
    %248 = vsyncpa [#allocation3], 1
    %s249 = scalar_lea.sflag [#allocation3], 1
    %250 = vsyncpa %s249, 1
    %251 = vsyncpa [#allocation4], 1
    %s252 = scalar_lea.sflag [#allocation4], 1
    %253 = vsyncpa %s252, 1

</llo_original>
